<compile_context>
chip_gen: v6e
topology: v6e:2x2x1
jax: 0.10.0
libtpu: 0.0.40
codegen_flags: <defaults>
</compile_context>

<pallas_src>
import jax
import jax.numpy as jnp
from jax.experimental import pallas as pl
from jax.experimental.pallas import tpu as pltpu


def _round_up(v, m):
    return ((v + m - 1) // m) * m


def _interconnect_kernel(wx_ref, wu_ref, xT_ref, uT_ref, out_ref):
    # One batch tile per grid step (batch on the lane axis):
    #   out(n_out, tb) = Wx @ xT + Wu @ uT
    # Both weight blocks are grid-constant (index_map -> (0,0)) so they stay
    # resident in VMEM; the two dots accumulate in the same f32 pass.
    out_ref[...] = (
        jnp.dot(wx_ref[...], xT_ref[...], preferred_element_type=jnp.float32)
        + jnp.dot(wu_ref[...], uT_ref[...], preferred_element_type=jnp.float32)
    ).astype(out_ref.dtype)


def interconnect_forward(x, u, A_xx, A_xu, A_yx, A_yu, nx, nu, ny, tile_nb=65536):
    """Mirrors Interconnect.forward for the block-free (pure linear) interconnect.

    x: (nb, nx) or (nb, nx, 1);  u: (nb, nu) or (nb, nu, 1)
    returns (y, xp) with the same view/squeeze semantics as the PyTorch module.
    """
    x_had_3d = (x.ndim > 2)
    x2 = x.reshape(x.shape[0], nx).astype(jnp.float32)
    u2 = u.reshape(u.shape[0], nu).astype(jnp.float32)
    nb = x2.shape[0]
    assert u2.shape[0] == nb

    n_out = nx + ny  # xp rows first, then y rows (in the transposed output)

    # Fused block weights (built once in XLA, kept resident in VMEM):
    #   Wx = [[A_xx], [A_yx]]  (n_out, nx)     Wu = [[A_xu], [A_yu]]  (n_out, nu)
    Wx = jnp.concatenate([A_xx, A_yx], axis=0).astype(jnp.float32)
    Wu = jnp.concatenate([A_xu, A_yu], axis=0).astype(jnp.float32)

    # Batch tiling on the lane axis: tile is a multiple of 128 lanes.  Clamp the
    # tile so the double-buffered VMEM footprint (~192 B/column) stays well under
    # v7x's 32 MiB default scoped VMEM; choose the number of grid steps first and
    # then the smallest 128-multiple tile that covers the (128-padded) batch, so
    # padding waste stays small instead of up to a whole tile.
    tile_nb = max(128, min(int(tile_nb), 131072))
    nb128 = _round_up(nb, 128)
    g = max(1, -(-nb128 // tile_nb))          # number of grid steps
    tb = _round_up(-(-nb128 // g), 128)       # columns per step (multiple of 128)
    nb_pad = g * tb

    # Transposed, zero-padded activations: (features, batch).  Feature dims (4, 3)
    # equal the full array dims, so the (8,128) BlockSpec rule is satisfied.
    xT = jnp.pad(x2.T, ((0, 0), (0, nb_pad - nb)))
    uT = jnp.pad(u2.T, ((0, 0), (0, nb_pad - nb)))

    cost = pl.CostEstimate(
        flops=2 * nb_pad * (nx + nu) * n_out,
        transcendentals=0,
        bytes_accessed=4 * (nb_pad * (nx + nu + n_out) + n_out * (nx + nu)),
    )

    out = pl.pallas_call(
        _interconnect_kernel,
        out_shape=jax.ShapeDtypeStruct((n_out, nb_pad), jnp.float32),
        grid=(g,),
        in_specs=[
            # fused weights: constant block -> resident in VMEM across the grid
            pl.BlockSpec((n_out, nx), lambda i: (0, 0)),
            pl.BlockSpec((n_out, nu), lambda i: (0, 0)),
            # activations: one lane-dense batch tile per step (auto double-buffered)
            pl.BlockSpec((nx, tb), lambda i: (0, i)),
            pl.BlockSpec((nu, tb), lambda i: (0, i)),
        ],
        out_specs=pl.BlockSpec((n_out, tb), lambda i: (0, i)),
        compiler_params=pltpu.CompilerParams(
            dimension_semantics=("parallel",),
        ),
        cost_estimate=cost,
    )(Wx, Wu, xT, uT)

    # Split the transposed output back into xp / y (free layout plumbing in XLA).
    xp2 = out[:nx, :nb].T          # (nb, nx)
    y2 = out[nx:n_out, :nb].T      # (nb, ny)

    # Reproduce the PyTorch view logic.
    xp = xp2.reshape(nb, nx, 1) if x_had_3d else xp2
    if ny == 1:
        y = y2.reshape(nb)
    else:  # ny >= 2
        y = y2.reshape(nb, ny)
    return y, xp


def _reference(x, u, A_xx, A_xu, A_yx, A_yu):
    xp = x @ A_xx.T + u @ A_xu.T
    y = x @ A_yx.T + u @ A_yu.T
    return y, xp


if __name__ == "__main__":
    key = jax.random.PRNGKey(0)
    kx, ku, k1, k2, k3, k4 = jax.random.split(key, 6)

    nx, nu, ny = 4, 3, 2

    # Deterministic "connection matrices" (what connect_signals with the
    # additive method would install as array_connection_matrices).
    A_xx = jax.random.normal(k1, (nx, nx), dtype=jnp.float32) * 0.5
    A_xu = jax.random.normal(k2, (nx, nu), dtype=jnp.float32) * 0.5
    A_yx = jax.random.normal(k3, (ny, nx), dtype=jnp.float32) * 0.5
    A_yu = jax.random.normal(k4, (ny, nu), dtype=jnp.float32) * 0.5

    # --- small case (matches module test sizes): single grid step ---
    nb = 8
    x = jax.random.normal(kx, (nb, nx), dtype=jnp.float32)
    u = jax.random.normal(ku, (nb, nu), dtype=jnp.float32)

    y, xp = interconnect_forward(x, u, A_xx, A_xu, A_yx, A_yu, nx, nu, ny)
    jax.block_until_ready((y, xp))

    y_ref, xp_ref = _reference(x, u, A_xx, A_xu, A_yx, A_yu)
    assert y.shape == (nb, ny) and xp.shape == (nb, nx)
    assert jnp.allclose(y, y_ref, atol=1e-5, rtol=1e-5)
    assert jnp.allclose(xp, xp_ref, atol=1e-5, rtol=1e-5)

    # --- 3-D state/input case: exercises the (nb, nx, 1) view semantics ---
    y3, xp3 = interconnect_forward(
        x.reshape(nb, nx, 1), u.reshape(nb, nu, 1),
        A_xx, A_xu, A_yx, A_yu, nx, nu, ny)
    jax.block_until_ready((y3, xp3))
    assert xp3.shape == (nb, nx, 1) and y3.shape == (nb, ny)
    assert jnp.allclose(xp3.reshape(nb, nx), xp_ref, atol=1e-5, rtol=1e-5)

    # --- ragged, multi-tile case: exercises batch tiling + lane padding path ---
    nb2 = 1037
    x2 = jax.random.normal(kx, (nb2, nx), dtype=jnp.float32)
    u2 = jax.random.normal(ku, (nb2, nu), dtype=jnp.float32)

    y2, xp2 = interconnect_forward(x2, u2, A_xx, A_xu, A_yx, A_yu, nx, nu, ny,
                                   tile_nb=512)
    jax.block_until_ready((y2, xp2))

    y2_ref, xp2_ref = _reference(x2, u2, A_xx, A_xu, A_yx, A_yu)
    assert y2.shape == (nb2, ny) and xp2.shape == (nb2, nx)
    assert jnp.allclose(y2, y2_ref, atol=1e-5, rtol=1e-5)
    assert jnp.allclose(xp2, xp2_ref, atol=1e-5, rtol=1e-5)

    print("KERNEL_OK")
</pallas_src>

<mosaic_0001>
module attributes {stable_mosaic.version = 11 : i64} {
  func.func @_interconnect_kernel(%arg0: i32, %arg1: memref<6x4xf32, #tpu.memory_space<vmem>>, %arg2: memref<6x3xf32, #tpu.memory_space<vmem>>, %arg3: memref<4x128xf32, #tpu.memory_space<vmem>>, %arg4: memref<3x128xf32, #tpu.memory_space<vmem>>, %arg5: memref<6x128xf32, #tpu.memory_space<vmem>>) attributes {dimension_semantics = [#tpu.dimension_semantics<parallel>], iteration_bounds = array<i64: 1>, scalar_prefetch = 0 : i64, scratch_operands = 0 : i64, tpu.core_type = #tpu.core_type<tc>, window_params = [{pipeline_mode = #tpu.pipeline_mode<synchronous>, transform_indices = @transform_0, window_bounds = array<i64: 6, 4>}, {pipeline_mode = #tpu.pipeline_mode<synchronous>, transform_indices = @transform_1, window_bounds = array<i64: 6, 3>}, {transform_indices = @transform_2, window_bounds = array<i64: 4, 128>}, {transform_indices = @transform_3, window_bounds = array<i64: 3, 128>}, {transform_indices = @transform_4, window_bounds = array<i64: 6, 128>}]} {
    %c0 = arith.constant 0 : index
    %c0_0 = arith.constant 0 : index
    %0 = vector.load %arg1[%c0, %c0_0] : memref<6x4xf32, #tpu.memory_space<vmem>>, vector<6x4xf32>
    %c0_1 = arith.constant 0 : index
    %c0_2 = arith.constant 0 : index
    %1 = vector.load %arg3[%c0_1, %c0_2] : memref<4x128xf32, #tpu.memory_space<vmem>>, vector<4x128xf32>
    %cst = arith.constant dense<0.000000e+00> : vector<6x128xf32>
    %2 = tpu.matmul %0, %1, %cst {dimension_numbers = #tpu.dot_dimension_numbers<[1], [0], [0], [1], [0, 0, 1, 1], [], []>} : vector<6x4xf32>, vector<4x128xf32>, vector<6x128xf32> -> vector<6x128xf32>
    %c0_3 = arith.constant 0 : index
    %c0_4 = arith.constant 0 : index
    %3 = vector.load %arg2[%c0_3, %c0_4] : memref<6x3xf32, #tpu.memory_space<vmem>>, vector<6x3xf32>
    %c0_5 = arith.constant 0 : index
    %c0_6 = arith.constant 0 : index
    %4 = vector.load %arg4[%c0_5, %c0_6] : memref<3x128xf32, #tpu.memory_space<vmem>>, vector<3x128xf32>
    %cst_7 = arith.constant dense<0.000000e+00> : vector<6x128xf32>
    %5 = tpu.matmul %3, %4, %cst_7 {dimension_numbers = #tpu.dot_dimension_numbers<[1], [0], [0], [1], [0, 0, 1, 1], [], []>} : vector<6x3xf32>, vector<3x128xf32>, vector<6x128xf32> -> vector<6x128xf32>
    %6 = arith.addf %2, %5 : vector<6x128xf32>
    %c0_8 = arith.constant 0 : index
    %c0_9 = arith.constant 0 : index
    %7 = vector.load %arg5[%c0_8, %c0_9] : memref<6x128xf32, #tpu.memory_space<vmem>>, vector<6x128xf32>
    tpu.vector_store %arg5[%c0_8, %c0_9], %6 {strides = array<i32>} : memref<6x128xf32, #tpu.memory_space<vmem>>, vector<6x128xf32>,
    return
  }
  func.func @transform_0(%arg0: i32) -> (i32, i32) {
    %c0_i32 = arith.constant 0 : i32
    %c0_i32_0 = arith.constant 0 : i32
    %c0_i32_1 = arith.constant 0 : i32
    return %c0_i32, %c0_i32_0 : i32, i32
  }
  func.func @transform_1(%arg0: i32) -> (i32, i32) {
    %c0_i32 = arith.constant 0 : i32
    %c0_i32_0 = arith.constant 0 : i32
    %c0_i32_1 = arith.constant 0 : i32
    return %c0_i32, %c0_i32_0 : i32, i32
  }
  func.func @transform_2(%arg0: i32) -> (i32, i32) {
    %c0_i32 = arith.constant 0 : i32
    %c0_i32_0 = arith.constant 0 : i32
    return %c0_i32, %arg0 : i32, i32
  }
  func.func @transform_3(%arg0: i32) -> (i32, i32) {
    %c0_i32 = arith.constant 0 : i32
    %c0_i32_0 = arith.constant 0 : i32
    return %c0_i32, %arg0 : i32, i32
  }
  func.func @transform_4(%arg0: i32) -> (i32, i32) {
    %c0_i32 = arith.constant 0 : i32
    %c0_i32_0 = arith.constant 0 : i32
    return %c0_i32, %arg0 : i32, i32
  }
}

</mosaic_0001>

<llo_original>
// kernel: tpu_custom_call.1
$region0: #{tpu_custom_call.1}
  #allocation0 [shape = 'u32[]', space=smem, size = 0x4, offset = 0x4, fixed_abs, tag = 'smem constant byte address 0x4 - core index']
  #allocation1 [shape = 'u32[144,128]{1,0:T(1,128)}', space=vmem, size = 0x12000, scoped, tag = 'internal scratch']
  %s0 = inlined_call_operand.vmem [shape: f32[6,4], index: 0, kind: input, shape index: {}]
  %s1 = inlined_call_operand.vmem [shape: f32[6,3], index: 1, kind: input, shape index: {}]
  %s2 = inlined_call_operand.vmem [shape: f32[4,128], index: 2, kind: input, shape index: {}]
  %s3 = inlined_call_operand.vmem [shape: f32[3,128], index: 3, kind: input, shape index: {}]
  %s4 = inlined_call_operand.hbm [shape: f32[6,128], index: 4, kind: output, shape index: {}]
  %s5 = sld [smem:[#allocation0]]
  $region26: #{tpu_custom_call.1} parent=0
    _
  %s7 = ssub.s32 1, %s5
  %s8 = scalar_select 0, %s7, %s5
  $region1: #{tpu_custom_call.1} parent=0
    #allocation2 [shape = 'u8[4096]{0}', space=vmem, size = 0x1000, scoped, tag = 'output window, operand 0, single buffered']
    #allocation3 [shape = 's32[1]{0}', space=sflag, size = 0x4, scoped, tag = 'scoped memory for tpu_custom_call.1']
    %9 = vsyncpa [#allocation3], 0
    // Predicated region
    $region2: #{tpu_custom_call.1} parent=1 // pred_check
      _
    $region3: #{tpu_custom_call.1} parent=1 // pred_check_branch
      %11 = sbr.rel (0) target = $region5
    $region4: #{tpu_custom_call.1} parent=1 // pred_region
      _
    $region5: #{tpu_custom_call.1} parent=1 // pred_fallthru
      _
    // Predicated region
    $region6: #{tpu_custom_call.1} parent=1 // pred_check
      _
    $region7: #{tpu_custom_call.1} parent=1 // pred_check_branch
      %13 = sbr.rel (0) target = $region9
    $region8: #{tpu_custom_call.1} parent=1 // pred_region
      _
    $region9: #{tpu_custom_call.1} parent=1 // pred_fallthru
      _
    // Predicated region
    $region10: #{tpu_custom_call.1} parent=1 // pred_check
      _
    $region11: #{tpu_custom_call.1} parent=1 // pred_check_branch
      %15 = sbr.rel (0) target = $region13
    $region12: #{tpu_custom_call.1} parent=1 // pred_region
      _
    $region13: #{tpu_custom_call.1} parent=1 // pred_fallthru
      _
    // Predicated region
    $region14: #{tpu_custom_call.1} parent=1 // pred_check
      _
    $region15: #{tpu_custom_call.1} parent=1 // pred_check_branch
      %17 = sbr.rel (0) target = $region17
    $region16: #{tpu_custom_call.1} parent=1 // pred_region
      _
    $region17: #{tpu_custom_call.1} parent=1 // pred_fallthru
      _
    %v18 = vld [vmem:[%s0] sm:$0x3f]
    %v19 = vld [vmem:[%s2] sm:$0xf]
    %v20 = vld [vmem:[%s1] sm:$0x3f]
    %v21 = vld [vmem:[%s3] sm:$0x7]
    %vm22 = vcmask 23552
    %v24 = vsel %vm22, %v20, 0
    %vm26 = vcmask 1042432
    %v28 = vsel %vm26, %v21, 0
    %30 = vmatprep.subr.mxu0 0.0
    %31 = vmatpush1.msra.mxu0 0.0
    %32 = vmatprep.subr.mxu0 0.0
    %33 = vmatpush1.msra.mxu0 0.0
    %34 = vmatprep.subr.mxu0 0.0
    %35 = vmatpush1.msra.mxu0 0.0
    %36 = vmatprep.subr.mxu0 0.0
    %37 = vmatpush1.msra.mxu0 0.0
    %38 = vmatprep.subr.mxu0 0.0
    %39 = vmatpush1.msra.mxu0 0.0
    %40 = vmatprep.subr.mxu0 0.0
    %41 = vmatpush1.msra.mxu0 0.0
    %42 = vmatprep.subr.mxu0 0.0
    %43 = vmatpush1.msra.mxu0 0.0
    %44 = vmatprep.subr.mxu0 0.0
    %45 = vmatpush1.msra.mxu0 0.0
    %46 = vmatprep.subr.mxu0 0.0
    %47 = vmatpush1.msra.mxu0 0.0
    %48 = vmatprep.subr.mxu0 0.0
    %49 = vmatpush1.msra.mxu0 0.0
    %50 = vmatprep.subr.mxu0 0.0
    %51 = vmatpush1.msra.mxu0 0.0
    %52 = vmatprep.subr.mxu0 0.0
    %53 = vmatpush1.msra.mxu0 0.0
    %54 = vmatprep.subr.mxu0 0.0
    %55 = vmatpush1.msra.mxu0 0.0
    %56 = vmatprep.subr.mxu0 0.0
    %57 = vmatpush1.msra.mxu0 0.0
    %58 = vmatprep.subr.mxu0 0.0
    %59 = vmatpush1.msra.mxu0 0.0
    %60 = vmatprep.subr.mxu0 0.0
    %61 = vmatpush1.msra.mxu0 %v28
    %62 = vmatprep.subr.mxu0 0.0
    %63 = vmatpush2.msra.mxu0 0.0
    %64 = vmatprep.subr.mxu0 0.0
    %65 = vmatpush2.msra.mxu0 0.0
    %66 = vmatprep.subr.mxu0 0.0
    %67 = vmatpush2.msra.mxu0 0.0
    %68 = vmatprep.subr.mxu0 0.0
    %69 = vmatpush2.msra.mxu0 0.0
    %70 = vmatprep.subr.mxu0 0.0
    %71 = vmatpush2.msra.mxu0 0.0
    %72 = vmatprep.subr.mxu0 0.0
    %73 = vmatpush2.msra.mxu0 0.0
    %74 = vmatprep.subr.mxu0 0.0
    %75 = vmatpush2.msra.mxu0 0.0
    %76 = vmatprep.subr.mxu0 0.0
    %77 = vmatpush2.msra.mxu0 0.0
    %78 = vmatprep.subr.mxu0 0.0
    %79 = vmatpush2.msra.mxu0 0.0
    %80 = vmatprep.subr.mxu0 0.0
    %81 = vmatpush2.msra.mxu0 0.0
    %82 = vmatprep.subr.mxu0 0.0
    %83 = vmatpush2.msra.mxu0 0.0
    %84 = vmatprep.subr.mxu0 0.0
    %85 = vmatpush2.msra.mxu0 0.0
    %86 = vmatprep.subr.mxu0 0.0
    %87 = vmatpush2.msra.mxu0 0.0
    %88 = vmatprep.subr.mxu0 0.0
    %89 = vmatpush2.msra.mxu0 0.0
    %90 = vmatprep.subr.mxu0 0.0
    %91 = vmatpush2.msra.mxu0 0.0
    %92 = vmatprep.subr.mxu0 0.0
    %93 = vmatpush2.msra.mxu0 0.0
    %94 = vmatprep.mubr.f32.mxu0 0.0
    %95 = vmatmul.mubr.f32.gmra.mxu0 %v24
    %v96 = vpop.f32.mrf.mxu0
    %v97 = vadd.f32 0.0, %v96
    %v98 = vpop.f32.mrf.mxu0
    %99 = vdwg.mxu0
    %vm100 = vcmask 31744
    %v102 = vsel %vm100, %v18, 0
    %vm104 = vcmask 1043456
    %v106 = vsel %vm104, %v19, 0
    %108 = vmatprep.subr.mxu0 0.0
    %109 = vmatpush1.msra.mxu0 0.0
    %110 = vmatprep.subr.mxu0 0.0
    %111 = vmatpush1.msra.mxu0 0.0
    %112 = vmatprep.subr.mxu0 0.0
    %113 = vmatpush1.msra.mxu0 0.0
    %114 = vmatprep.subr.mxu0 0.0
    %115 = vmatpush1.msra.mxu0 0.0
    %116 = vmatprep.subr.mxu0 0.0
    %117 = vmatpush1.msra.mxu0 0.0
    %118 = vmatprep.subr.mxu0 0.0
    %119 = vmatpush1.msra.mxu0 0.0
    %120 = vmatprep.subr.mxu0 0.0
    %121 = vmatpush1.msra.mxu0 0.0
    %122 = vmatprep.subr.mxu0 0.0
    %123 = vmatpush1.msra.mxu0 0.0
    %124 = vmatprep.subr.mxu0 0.0
    %125 = vmatpush1.msra.mxu0 0.0
    %126 = vmatprep.subr.mxu0 0.0
    %127 = vmatpush1.msra.mxu0 0.0
    %128 = vmatprep.subr.mxu0 0.0
    %129 = vmatpush1.msra.mxu0 0.0
    %130 = vmatprep.subr.mxu0 0.0
    %131 = vmatpush1.msra.mxu0 0.0
    %132 = vmatprep.subr.mxu0 0.0
    %133 = vmatpush1.msra.mxu0 0.0
    %134 = vmatprep.subr.mxu0 0.0
    %135 = vmatpush1.msra.mxu0 0.0
    %136 = vmatprep.subr.mxu0 0.0
    %137 = vmatpush1.msra.mxu0 0.0
    %138 = vmatprep.subr.mxu0 0.0
    %139 = vmatpush1.msra.mxu0 %v106
    %140 = vmatprep.subr.mxu0 0.0
    %141 = vmatpush2.msra.mxu0 0.0
    %142 = vmatprep.subr.mxu0 0.0
    %143 = vmatpush2.msra.mxu0 0.0
    %144 = vmatprep.subr.mxu0 0.0
    %145 = vmatpush2.msra.mxu0 0.0
    %146 = vmatprep.subr.mxu0 0.0
    %147 = vmatpush2.msra.mxu0 0.0
    %148 = vmatprep.subr.mxu0 0.0
    %149 = vmatpush2.msra.mxu0 0.0
    %150 = vmatprep.subr.mxu0 0.0
    %151 = vmatpush2.msra.mxu0 0.0
    %152 = vmatprep.subr.mxu0 0.0
    %153 = vmatpush2.msra.mxu0 0.0
    %154 = vmatprep.subr.mxu0 0.0
    %155 = vmatpush2.msra.mxu0 0.0
    %156 = vmatprep.subr.mxu0 0.0
    %157 = vmatpush2.msra.mxu0 0.0
    %158 = vmatprep.subr.mxu0 0.0
    %159 = vmatpush2.msra.mxu0 0.0
    %160 = vmatprep.subr.mxu0 0.0
    %161 = vmatpush2.msra.mxu0 0.0
    %162 = vmatprep.subr.mxu0 0.0
    %163 = vmatpush2.msra.mxu0 0.0
    %164 = vmatprep.subr.mxu0 0.0
    %165 = vmatpush2.msra.mxu0 0.0
    %166 = vmatprep.subr.mxu0 0.0
    %167 = vmatpush2.msra.mxu0 0.0
    %168 = vmatprep.subr.mxu0 0.0
    %169 = vmatpush2.msra.mxu0 0.0
    %170 = vmatprep.subr.mxu0 0.0
    %171 = vmatpush2.msra.mxu0 0.0
    %172 = vmatprep.mubr.f32.mxu0 0.0
    %173 = vmatmul.mubr.f32.gmra.mxu0 %v102
    %v174 = vpop.f32.mrf.mxu0
    %v175 = vadd.f32 %v97, %v174
    %v176 = vpop.f32.mrf.mxu0
    %177 = vdwg.mxu0
    %178 = vst [vmem:[#allocation2] sm:$0x3f] %v175
    // Predicated region
    $region18: #{tpu_custom_call.1} parent=1 // pred_check
      _
    $region19: #{tpu_custom_call.1} parent=1 // pred_check_branch
      %180 = sbr.rel (0) target = $region21
    $region20: #{tpu_custom_call.1} parent=1 // pred_region
      %s182 = ssub.s32 128, 128
      %183 = vsyncadd [#allocation3], %s182
      %s185 = sshll.u32 [#allocation2], 4
      %s186 = int_to_ptr.vmem [resolvable:$true] %s185
      %188 = dma.vmem_to_hbm [thread:$0]  %s186, 128, %s4, [#allocation3]
    $region21: #{tpu_custom_call.1} parent=1 // pred_fallthru
      _
    // Predicated region
    $region22: #{tpu_custom_call.1} parent=1 // pred_check
      _
    $region23: #{tpu_custom_call.1} parent=1 // pred_check_branch
      %190 = sbr.rel (0) target = $region25
    $region24: #{tpu_custom_call.1} parent=1 // pred_region
      %191 = dma.done [#allocation3], 128
    $region25: #{tpu_custom_call.1} parent=1 // pred_fallthru
      _
    %192 = vsyncpa [#allocation3], 1

</llo_original>
